<compile_context>
chip_gen: v7x
topology: tpu7x:2x2x1
jax: 0.10.0
libtpu: 0.0.40
codegen_flags: <defaults>
</compile_context>

<pallas_src>
import functools

import jax
import jax.numpy as jnp
from jax.experimental import pallas as pl
from jax.experimental.pallas import tpu as pltpu


def _round_up(x, m):
    return ((x + m - 1) // m) * m


# ---------------------------------------------------------------------------
# Kernel A: projection.  h = X @ W^T + b_W  and fused attention scores
#           s[:, 0] = h . a1 + b_a   (self term)
#           s[:, 1] = h . a2         (neighbour term, gathered in kernel B)
# Row-tiled over nodes, fully parallel, MXU fed bf16 with f32 accumulation.
# ---------------------------------------------------------------------------
def proj_kernel(x_ref, wt_ref, bw_ref, a12_ref, ba2_ref, h_ref, s_ref):
    x = x_ref[...].astype(jnp.bfloat16)
    wt = wt_ref[...].astype(jnp.bfloat16)
    h = jnp.dot(x, wt, preferred_element_type=jnp.float32) + bw_ref[...]      # (tm, Fp) f32
    h_bf = h.astype(jnp.bfloat16)
    h_ref[...] = h_bf
    # fused [a1 | a2] right-hand side: one (Fp, 2) matmul instead of two (Fp, 1)
    s_ref[...] = jnp.dot(h_bf, a12_ref[...].astype(jnp.bfloat16),
                         preferred_element_type=jnp.float32) + ba2_ref[...]   # (tm, 2) f32


# ---------------------------------------------------------------------------
# Kernel B: attention.  e[i, j] = leaky_relu(s_self[i] + s_nbr[adj[i, j]])
#           att = softmax(e, axis=1);  out = att @ h
# Row-tiled over nodes; full bf16 h and the neighbour-score row stay resident
# (constant index_map -> single DMA across the whole grid).
# ---------------------------------------------------------------------------
def attn_kernel(adj_ref, s_self_ref, s_nbr_ref, h_ref, out_ref, *, use_gather):
    adjv = adj_ref[...]                                      # (tm, N) int32
    tm, n = adjv.shape

    if use_gather:
        # Vectorized lane gather: g[i, j] = s_nbr[adj[i, j]]   (off the VALU path)
        src = jnp.broadcast_to(s_nbr_ref[...], (tm, n))       # (1, N) -> (tm, N) sublane bcast
        g = jnp.take_along_axis(src, adjv, axis=1)
    else:
        # Fallback ONLY if the gather lowering is unavailable on this jax/TPU version:
        # masked accumulation (known-good lowering).
        g = jnp.zeros((tm, n), jnp.float32)
        for k in range(n):
            g = g + jnp.where(adjv == k, s_nbr_ref[0, k], 0.0)

    e = s_self_ref[...] + g                                   # (tm, N)
    e = jnp.where(e >= 0.0, e, 0.2 * e)                       # leaky_relu, slope 0.2

    m = jnp.max(e, axis=1, keepdims=True)
    p = jnp.exp(e - m)                                        # EUP
    att = p * pl.reciprocal(jnp.sum(p, axis=1, keepdims=True), approx=True)   # EUP, not VALU div

    # h_prime = att @ h  -- MXU, bf16 operands, f32 accumulation, lane-dense store
    out_ref[...] = jnp.dot(att.astype(jnp.bfloat16), h_ref[...],
                           preferred_element_type=jnp.float32)


def graph_attention_layer(X, adj, W, b_W, a_W, a_b, *, block_rows=None):
    """Pallas forward.  W: (Fout, Fin), b_W: (Fout,), a_W: (1, 2*Fout), a_b: (1,)."""
    X = jnp.asarray(X, jnp.float32)
    adj_i32 = jnp.asarray(adj, jnp.int32)
    N, Fin = X.shape
    Fout = W.shape[0]
    if adj_i32.shape != (N, N):
        raise ValueError("adj must be (N, N): torch.matmul(attention.unsqueeze(1), h) needs K == N")

    # Row tile over nodes (sublane axis): biggest tile <= 128 that divides N.
    if block_rows is None:
        block_rows = N if N <= 128 else 128
    if N % block_rows != 0:
        raise ValueError("N must be a multiple of the row tile")
    grid = (N // block_rows,)

    # Lane-dim padding (feature axes) to multiples of 128: unmasked vld/vst, aligned MXU.
    Fin_p = _round_up(Fin, 128)
    Fout_p = _round_up(Fout, 128)

    Xp = jnp.pad(X, ((0, 0), (0, Fin_p - Fin)))
    Wt = jnp.asarray(W, jnp.float32).T                         # (Fin, Fout)
    Wtp = jnp.pad(Wt, ((0, Fin_p - Fin), (0, Fout_p - Fout)))  # (Fin_p, Fout_p)
    bWp = jnp.pad(jnp.asarray(b_W, jnp.float32).reshape(1, Fout),
                  ((0, 0), (0, Fout_p - Fout)))                # (1, Fout_p)
    a12 = jnp.asarray(a_W, jnp.float32).reshape(2, Fout).T     # (Fout, 2): col0=self, col1=nbr
    a12p = jnp.pad(a12, ((0, Fout_p - Fout), (0, 0)))          # (Fout_p, 2)
    ba2 = jnp.concatenate([jnp.asarray(a_b, jnp.float32).reshape(1),
                           jnp.zeros((1,), jnp.float32)]).reshape(1, 2)

    cparams = pltpu.CompilerParams(dimension_semantics=("parallel",),
                                   vmem_limit_bytes=32 * 1024 * 1024)

    # ---- kernel A: projection + fused attention scores --------------------
    h_bf, scores = pl.pallas_call(
        proj_kernel,
        out_shape=(jax.ShapeDtypeStruct((N, Fout_p), jnp.bfloat16),
                   jax.ShapeDtypeStruct((N, 2), jnp.float32)),
        grid_spec=pltpu.PrefetchScalarGridSpec(
            num_scalar_prefetch=0,
            grid=grid,
            in_specs=[pl.BlockSpec((block_rows, Fin_p), lambda i: (i, 0)),
                      pl.BlockSpec((Fin_p, Fout_p), lambda i: (0, 0)),
                      pl.BlockSpec((1, Fout_p), lambda i: (0, 0)),
                      pl.BlockSpec((Fout_p, 2), lambda i: (0, 0)),
                      pl.BlockSpec((1, 2), lambda i: (0, 0))],
            out_specs=[pl.BlockSpec((block_rows, Fout_p), lambda i: (i, 0)),
                       pl.BlockSpec((block_rows, 2), lambda i: (i, 0))]),
        compiler_params=cparams,
    )(Xp, Wtp, bWp, a12p, ba2)

    # Tiny layout plumbing in plain JAX (XLA): self scores as a column, neighbour
    # scores as a lane-dense (1, N) row -> gather source for kernel B.
    s_self = scores[:, 0:1]                                   # (N, 1)
    s_nbr_row = scores[:, 1].reshape(1, N)                    # (1, N)

    # ---- kernel B: gather + softmax + att @ h ------------------------------
    def call_attn(use_gather):
        return pl.pallas_call(
            functools.partial(attn_kernel, use_gather=use_gather),
            out_shape=jax.ShapeDtypeStruct((N, Fout_p), jnp.float32),
            grid_spec=pltpu.PrefetchScalarGridSpec(
                num_scalar_prefetch=0,
                grid=grid,
                in_specs=[pl.BlockSpec((block_rows, N), lambda i: (i, 0)),
                          pl.BlockSpec((block_rows, 1), lambda i: (i, 0)),
                          pl.BlockSpec((1, N), lambda i: (0, 0)),
                          pl.BlockSpec((N, Fout_p), lambda i: (0, 0))],
                out_specs=pl.BlockSpec((block_rows, Fout_p), lambda i: (i, 0))),
            compiler_params=cparams,
        )(adj_i32, s_self, s_nbr_row, h_bf)

    try:
        out_p = jax.block_until_ready(call_attn(True))
    except Exception:
        # Gather lowering unavailable -> masked-accumulation fallback (still runs clean).
        out_p = jax.block_until_ready(call_attn(False))
    return out_p[:, :Fout]                                    # strip lane padding


def reference_forward(X, adj, W, b_W, a_W, a_b):
    """Pure-JAX (f32) reference of the (intended) torch forward."""
    h = X @ W.T + b_W                                             # (N, F)
    N, F = h.shape
    K = adj.shape[1]
    h_rep = jnp.broadcast_to(h[:, None, :], (N, K, F))            # h[i] broadcast over its row
    h_nbr = h[adj]                                                # (N, K, F) == h[adj]
    a_in = jnp.concatenate([h_rep, h_nbr], axis=2)                # (N, K, 2F)
    e = jax.nn.leaky_relu(jnp.squeeze(a_in @ a_W.T + a_b, axis=2), negative_slope=0.2)
    att = jax.nn.softmax(e, axis=1)                               # (N, K)
    return jnp.matmul(att[:, None, :], h)[:, 0, :]                # (N, F)  (requires K == N)


if __name__ == "__main__":
    key = jax.random.PRNGKey(0)
    N, Fin, Fout = 8, 16, 32
    k1, k2, k3, k4, k5, k6 = jax.random.split(key, 6)

    X = jax.random.normal(k1, (N, Fin), dtype=jnp.float32)
    adj = jax.random.randint(k2, (N, N), 0, N, dtype=jnp.int32)

    # Deterministic synthetic parameters (shapes from nn.Linear(in,out) / nn.Linear(2*out,1)).
    W = 0.1 * jax.random.normal(k3, (Fout, Fin), dtype=jnp.float32)
    b_W = 0.1 * jax.random.normal(k4, (Fout,), dtype=jnp.float32)
    a_W = 0.1 * jax.random.normal(k5, (1, 2 * Fout), dtype=jnp.float32)
    a_b = 0.1 * jax.random.normal(k6, (1,), dtype=jnp.float32)

    out = graph_attention_layer(X, adj, W, b_W, a_W, a_b)
    out = jax.block_until_ready(out)

    ref = reference_forward(X, adj, W, b_W, a_W, a_b)
    assert out.shape == (N, Fout)
    # bf16 MXU operands + approx reciprocal => looser tolerance than pure-f32.
    if not bool(jnp.allclose(out, ref, atol=2e-2, rtol=2e-2)):
        raise AssertionError("Pallas kernel output does not match JAX reference")
    print("KERNEL_OK")
</pallas_src>

<mosaic_0001>
module attributes {stable_mosaic.version = 11 : i64} {
  func.func @proj_kernel(%arg0: i32, %arg1: memref<8x128xf32, #tpu.memory_space<vmem>>, %arg2: memref<128x128xf32, #tpu.memory_space<vmem>>, %arg3: memref<1x128xf32, #tpu.memory_space<vmem>>, %arg4: memref<128x2xf32, #tpu.memory_space<vmem>>, %arg5: memref<1x2xf32, #tpu.memory_space<vmem>>, %arg6: memref<8x128xbf16, #tpu.memory_space<vmem>>, %arg7: memref<8x2xf32, #tpu.memory_space<vmem>>) attributes {dimension_semantics = [#tpu.dimension_semantics<parallel>], iteration_bounds = array<i64: 1>, scalar_prefetch = 0 : i64, scratch_operands = 0 : i64, tpu.core_type = #tpu.core_type<tc>, window_params = [{transform_indices = @transform_0, window_bounds = array<i64: 8, 128>}, {pipeline_mode = #tpu.pipeline_mode<synchronous>, transform_indices = @transform_1, window_bounds = array<i64: 128, 128>}, {pipeline_mode = #tpu.pipeline_mode<synchronous>, transform_indices = @transform_2, window_bounds = array<i64: 1, 128>}, {pipeline_mode = #tpu.pipeline_mode<synchronous>, transform_indices = @transform_3, window_bounds = array<i64: 128, 2>}, {pipeline_mode = #tpu.pipeline_mode<synchronous>, transform_indices = @transform_4, window_bounds = array<i64: 1, 2>}, {transform_indices = @transform_5, window_bounds = array<i64: 8, 128>}, {transform_indices = @transform_6, window_bounds = array<i64: 8, 2>}]} {
    %c0 = arith.constant 0 : index
    %c0_0 = arith.constant 0 : index
    %0 = vector.load %arg1[%c0, %c0_0] : memref<8x128xf32, #tpu.memory_space<vmem>>, vector<8x128xf32>
    %1 = arith.truncf %0 : vector<8x128xf32> to vector<8x128xbf16>
    %c0_1 = arith.constant 0 : index
    %c0_2 = arith.constant 0 : index
    %2 = vector.load %arg2[%c0_1, %c0_2] : memref<128x128xf32, #tpu.memory_space<vmem>>, vector<128x128xf32>
    %3 = arith.truncf %2 : vector<128x128xf32> to vector<128x128xbf16>
    %cst = arith.constant dense<0.000000e+00> : vector<8x128xf32>
    %4 = tpu.matmul %1, %3, %cst {dimension_numbers = #tpu.dot_dimension_numbers<[1], [0], [0], [1], [0, 0, 1, 1], [], []>} : vector<8x128xbf16>, vector<128x128xbf16>, vector<8x128xf32> -> vector<8x128xf32>
    %c0_3 = arith.constant 0 : index
    %c0_4 = arith.constant 0 : index
    %5 = vector.load %arg3[%c0_3, %c0_4] : memref<1x128xf32, #tpu.memory_space<vmem>>, vector<1x128xf32>
    %6 = vector.broadcast %5 : vector<1x128xf32> to vector<8x128xf32>
    %7 = arith.addf %4, %6 : vector<8x128xf32>
    %8 = arith.truncf %7 : vector<8x128xf32> to vector<8x128xbf16>
    %c0_5 = arith.constant 0 : index
    %c0_6 = arith.constant 0 : index
    %9 = vector.load %arg6[%c0_5, %c0_6] : memref<8x128xbf16, #tpu.memory_space<vmem>>, vector<8x128xbf16>
    tpu.vector_store %arg6[%c0_5, %c0_6], %8 {strides = array<i32>} : memref<8x128xbf16, #tpu.memory_space<vmem>>, vector<8x128xbf16>,
    %c0_7 = arith.constant 0 : index
    %c0_8 = arith.constant 0 : index
    %10 = vector.load %arg4[%c0_7, %c0_8] : memref<128x2xf32, #tpu.memory_space<vmem>>, vector<128x2xf32>
    %11 = arith.truncf %10 : vector<128x2xf32> to vector<128x2xbf16>
    %cst_9 = arith.constant dense<0.000000e+00> : vector<8x2xf32>
    %12 = tpu.matmul %8, %11, %cst_9 {dimension_numbers = #tpu.dot_dimension_numbers<[1], [0], [0], [1], [0, 0, 1, 1], [], []>} : vector<8x128xbf16>, vector<128x2xbf16>, vector<8x2xf32> -> vector<8x2xf32>
    %c0_10 = arith.constant 0 : index
    %c0_11 = arith.constant 0 : index
    %13 = vector.load %arg5[%c0_10, %c0_11] : memref<1x2xf32, #tpu.memory_space<vmem>>, vector<1x2xf32>
    %14 = vector.broadcast %13 : vector<1x2xf32> to vector<8x2xf32>
    %15 = arith.addf %12, %14 : vector<8x2xf32>
    %c0_12 = arith.constant 0 : index
    %c0_13 = arith.constant 0 : index
    %16 = vector.load %arg7[%c0_12, %c0_13] : memref<8x2xf32, #tpu.memory_space<vmem>>, vector<8x2xf32>
    tpu.vector_store %arg7[%c0_12, %c0_13], %15 {strides = array<i32>} : memref<8x2xf32, #tpu.memory_space<vmem>>, vector<8x2xf32>,
    return
  }
  func.func @transform_0(%arg0: i32) -> (i32, i32) {
    %c0_i32 = arith.constant 0 : i32
    %c0_i32_0 = arith.constant 0 : i32
    return %arg0, %c0_i32 : i32, i32
  }
  func.func @transform_1(%arg0: i32) -> (i32, i32) {
    %c0_i32 = arith.constant 0 : i32
    %c0_i32_0 = arith.constant 0 : i32
    %c0_i32_1 = arith.constant 0 : i32
    return %c0_i32, %c0_i32_0 : i32, i32
  }
  func.func @transform_2(%arg0: i32) -> (i32, i32) {
    %c0_i32 = arith.constant 0 : i32
    %c0_i32_0 = arith.constant 0 : i32
    %c0_i32_1 = arith.constant 0 : i32
    return %c0_i32, %c0_i32_0 : i32, i32
  }
  func.func @transform_3(%arg0: i32) -> (i32, i32) {
    %c0_i32 = arith.constant 0 : i32
    %c0_i32_0 = arith.constant 0 : i32
    %c0_i32_1 = arith.constant 0 : i32
    return %c0_i32, %c0_i32_0 : i32, i32
  }
  func.func @transform_4(%arg0: i32) -> (i32, i32) {
    %c0_i32 = arith.constant 0 : i32
    %c0_i32_0 = arith.constant 0 : i32
    %c0_i32_1 = arith.constant 0 : i32
    return %c0_i32, %c0_i32_0 : i32, i32
  }
  func.func @transform_5(%arg0: i32) -> (i32, i32) {
    %c0_i32 = arith.constant 0 : i32
    %c0_i32_0 = arith.constant 0 : i32
    return %arg0, %c0_i32 : i32, i32
  }
  func.func @transform_6(%arg0: i32) -> (i32, i32) {
    %c0_i32 = arith.constant 0 : i32
    %c0_i32_0 = arith.constant 0 : i32
    return %arg0, %c0_i32 : i32, i32
  }
}

</mosaic_0001>

<llo_original>
// kernel: tpu_custom_call.1
$region0: #{tpu_custom_call.1}
  #allocation0 [shape = 'u32[]', space=smem, size = 0x4, offset = 0x4, fixed_abs, tag = 'smem constant byte address 0x4 - core index']
  #allocation1 [shape = 'u32[144,128]{1,0:T(1,128)}', space=vmem, size = 0x12000, scoped, tag = 'internal scratch']
  %s0 = inlined_call_operand.hbm [shape: f32[8,128], index: 0, kind: input, shape index: {}]
  %s1 = inlined_call_operand.vmem [shape: f32[128,128], index: 1, kind: input, shape index: {}]
  %s2 = inlined_call_operand.vmem [shape: f32[1,128], index: 2, kind: input, shape index: {}]
  %s3 = inlined_call_operand.vmem [shape: f32[128,2], index: 3, kind: input, shape index: {}]
  %s4 = inlined_call_operand.vmem [shape: f32[1,2], index: 4, kind: input, shape index: {}]
  %s5 = inlined_call_operand.hbm [shape: bf16[8,128], index: 5, kind: output, shape index: {0}]
  %s6 = inlined_call_operand.vmem [shape: f32[8,2], index: 6, kind: output, shape index: {1}]
  %7 = xla_tuple %s5, %s6
  %s8 = sld [smem:[#allocation0]]
  $region42: #{tpu_custom_call.1} parent=0
    _
  %s10 = ssub.s32 1, %s8
  %s11 = scalar_select 0, %s10, %s8
  $region1: #{tpu_custom_call.1} parent=0
    #allocation2 [shape = 'u8[4096]{0}', space=vmem, size = 0x1000, scoped, tag = 'input window, operand 0, single buffered']
    #allocation3 [shape = 's32[1]{0}', space=sflag, size = 0x4, scoped, tag = 'scoped memory for tpu_custom_call.1']
    #allocation4 [shape = 's32[1]{0}', space=sflag, size = 0x4, scoped, tag = 'scoped memory for tpu_custom_call.1']
    #allocation5 [shape = 'u8[2048]{0}', space=vmem, size = 0x800, scoped, tag = 'output window, operand 0, single buffered']
    %12 = vsyncpa [#allocation3], 0
    %13 = vsyncpa [#allocation4], 0
    // Predicated region
    $region2: #{tpu_custom_call.1} parent=1 // pred_check
      _
    $region3: #{tpu_custom_call.1} parent=1 // pred_check_branch
      %15 = sbr.rel (0) target = $region5
    $region4: #{tpu_custom_call.1} parent=1 // pred_region
      %s17 = ssub.s32 128, 128
      %18 = vsyncadd [#allocation3], %s17
      %s20 = sshll.u32 [#allocation2], 4
      %s21 = int_to_ptr.vmem [resolvable:$true] %s20
      %23 = dma.hbm_to_vmem [thread:$0]  %s0, 128, %s21, [#allocation3]
    $region5: #{tpu_custom_call.1} parent=1 // pred_fallthru
      _
    // Predicated region
    $region6: #{tpu_custom_call.1} parent=1 // pred_check
      _
    $region7: #{tpu_custom_call.1} parent=1 // pred_check_branch
      %25 = sbr.rel (0) target = $region9
    $region8: #{tpu_custom_call.1} parent=1 // pred_region
      _
    $region9: #{tpu_custom_call.1} parent=1 // pred_fallthru
      _
    // Predicated region
    $region10: #{tpu_custom_call.1} parent=1 // pred_check
      _
    $region11: #{tpu_custom_call.1} parent=1 // pred_check_branch
      %27 = sbr.rel (0) target = $region13
    $region12: #{tpu_custom_call.1} parent=1 // pred_region
      _
    $region13: #{tpu_custom_call.1} parent=1 // pred_fallthru
      _
    // Predicated region
    $region14: #{tpu_custom_call.1} parent=1 // pred_check
      _
    $region15: #{tpu_custom_call.1} parent=1 // pred_check_branch
      %29 = sbr.rel (0) target = $region17
    $region16: #{tpu_custom_call.1} parent=1 // pred_region
      _
    $region17: #{tpu_custom_call.1} parent=1 // pred_fallthru
      _
    // Predicated region
    $region18: #{tpu_custom_call.1} parent=1 // pred_check
      _
    $region19: #{tpu_custom_call.1} parent=1 // pred_check_branch
      %31 = sbr.rel (0) target = $region21
    $region20: #{tpu_custom_call.1} parent=1 // pred_region
      _
    $region21: #{tpu_custom_call.1} parent=1 // pred_fallthru
      _
    // Predicated region
    $region22: #{tpu_custom_call.1} parent=1 // pred_check
      _
    $region23: #{tpu_custom_call.1} parent=1 // pred_check_branch
      %33 = sbr.rel (0) target = $region25
    $region24: #{tpu_custom_call.1} parent=1 // pred_region
      %34 = dma.done [#allocation3], 128
    $region25: #{tpu_custom_call.1} parent=1 // pred_fallthru
      _
    %v36 = vld [vmem:[#allocation2] sm:$0xff]
    %v37 = vpack.c.bf16 %v36, %v36
    %v38 = vld [vmem:[%s1] sm:$0xff]
    %v39 = vld [vmem:[%s1 + $0x8] sm:$0xff]
    %v40 = vld [vmem:[%s1 + $0x10] sm:$0xff]
    %v41 = vld [vmem:[%s1 + $0x18] sm:$0xff]
    %v42 = vld [vmem:[%s1 + $0x20] sm:$0xff]
    %v43 = vld [vmem:[%s1 + $0x28] sm:$0xff]
    %v44 = vld [vmem:[%s1 + $0x30] sm:$0xff]
    %v45 = vld [vmem:[%s1 + $0x38] sm:$0xff]
    %v46 = vld [vmem:[%s1 + $0x40] sm:$0xff]
    %v47 = vld [vmem:[%s1 + $0x48] sm:$0xff]
    %v48 = vld [vmem:[%s1 + $0x50] sm:$0xff]
    %v49 = vld [vmem:[%s1 + $0x58] sm:$0xff]
    %v50 = vld [vmem:[%s1 + $0x60] sm:$0xff]
    %v51 = vld [vmem:[%s1 + $0x68] sm:$0xff]
    %v52 = vld [vmem:[%s1 + $0x70] sm:$0xff]
    %v53 = vld [vmem:[%s1 + $0x78] sm:$0xff]
    %v54 = vpack.c.bf16 %v39, %v38
    %v55 = vpack.c.bf16 %v41, %v40
    %v56 = vpack.c.bf16 %v43, %v42
    %v57 = vpack.c.bf16 %v45, %v44
    %v58 = vpack.c.bf16 %v47, %v46
    %v59 = vpack.c.bf16 %v49, %v48
    %v60 = vpack.c.bf16 %v51, %v50
    %v61 = vpack.c.bf16 %v53, %v52
    %v62 = vld [vmem:[%s2] sm:$0x1]
    %v64 = vlaneseq
    %v65 = vshrl.u32 %v64, 7
    %v66 = vsub.s32 0, %v65
    %v67 = vrot.slane %v62, %v66
    %69 = vmatprep.subr.bf16.mxu0 0
    %70 = vmatpush1.bf16.msra.mxu0 %v54
    %71 = vmatprep.subr.bf16.mxu0 0
    %72 = vmatpush1.bf16.msra.mxu0 %v55
    %73 = vmatprep.subr.bf16.mxu0 0
    %74 = vmatpush1.bf16.msra.mxu0 %v56
    %75 = vmatprep.subr.bf16.mxu0 0
    %76 = vmatpush1.bf16.msra.mxu0 %v57
    %77 = vmatprep.subr.bf16.mxu0 0
    %78 = vmatpush1.bf16.msra.mxu0 %v58
    %79 = vmatprep.subr.bf16.mxu0 0
    %80 = vmatpush1.bf16.msra.mxu0 %v59
    %81 = vmatprep.subr.bf16.mxu0 0
    %82 = vmatpush1.bf16.msra.mxu0 %v60
    %83 = vmatprep.subr.bf16.mxu0 0
    %84 = vmatpush1.bf16.msra.mxu0 %v61
    %85 = vmatprep.subr.bf16.mxu0 0
    %86 = vmatpush1.bf16.msra.mxu0 0
    %87 = vmatprep.subr.bf16.mxu0 0
    %88 = vmatpush1.bf16.msra.mxu0 0
    %89 = vmatprep.subr.bf16.mxu0 0
    %90 = vmatpush1.bf16.msra.mxu0 0
    %91 = vmatprep.subr.bf16.mxu0 0
    %92 = vmatpush1.bf16.msra.mxu0 0
    %93 = vmatprep.subr.bf16.mxu0 0
    %94 = vmatpush1.bf16.msra.mxu0 0
    %95 = vmatprep.subr.bf16.mxu0 0
    %96 = vmatpush1.bf16.msra.mxu0 0
    %97 = vmatprep.subr.bf16.mxu0 0
    %98 = vmatpush1.bf16.msra.mxu0 0
    %99 = vmatprep.subr.bf16.mxu0 0
    %100 = vmatpush1.bf16.msra.mxu0 0
    %101 = vmatprep.mubr.bf16.mxu0 0
    %102 = vmatmul.mubr.bf16.gmra.mrb[0].mxu0 %v37
    %v103 = vpop.f32.mrb[0].mxu0
    %v104 = vadd.f32 %v67, %v103
    %v105 = vpop.f32.mrb[0].mxu0
    %v106 = vpop.f32.mrb[0].mxu0
    %v107 = vpop.f32.mrb[0].mxu0
    %108 = vdwg.mxu0
    %v109 = vpack.c.bf16 %v104, %v104
    %110 = vst [vmem:[#allocation5] sm:$0xf] %v109
    %v111 = vld [vmem:[%s3] sm:$0xff]
    %v112 = vld [vmem:[%s3 + $0x8] sm:$0xff]
    %v113 = vld [vmem:[%s3 + $0x10] sm:$0xff]
    %v114 = vld [vmem:[%s3 + $0x18] sm:$0xff]
    %v115 = vld [vmem:[%s3 + $0x20] sm:$0xff]
    %v116 = vld [vmem:[%s3 + $0x28] sm:$0xff]
    %v117 = vld [vmem:[%s3 + $0x30] sm:$0xff]
    %v118 = vld [vmem:[%s3 + $0x38] sm:$0xff]
    %v119 = vld [vmem:[%s3 + $0x40] sm:$0xff]
    %v120 = vld [vmem:[%s3 + $0x48] sm:$0xff]
    %v121 = vld [vmem:[%s3 + $0x50] sm:$0xff]
    %v122 = vld [vmem:[%s3 + $0x58] sm:$0xff]
    %v123 = vld [vmem:[%s3 + $0x60] sm:$0xff]
    %v124 = vld [vmem:[%s3 + $0x68] sm:$0xff]
    %v125 = vld [vmem:[%s3 + $0x70] sm:$0xff]
    %v126 = vld [vmem:[%s3 + $0x78] sm:$0xff]
    %v127 = vpack.c.bf16 %v112, %v111
    %v128 = vpack.c.bf16 %v114, %v113
    %v129 = vpack.c.bf16 %v116, %v115
    %v130 = vpack.c.bf16 %v118, %v117
    %v131 = vpack.c.bf16 %v120, %v119
    %v132 = vpack.c.bf16 %v122, %v121
    %v133 = vpack.c.bf16 %v124, %v123
    %v134 = vpack.c.bf16 %v126, %v125
    %v135 = vld [vmem:[%s4] sm:$0x1]
    %v137 = vlaneseq
    %v138 = vshrl.u32 %v137, 7
    %v139 = vsub.s32 0, %v138
    %v140 = vrot.slane %v135, %v139
    %142 = vmatprep.subr.bf16.mxu0 0
    %143 = vmatpush1.bf16.msra.mxu0 %v127
    %144 = vmatprep.subr.bf16.mxu0 0
    %145 = vmatpush1.bf16.msra.mxu0 %v128
    %146 = vmatprep.subr.bf16.mxu0 0
    %147 = vmatpush1.bf16.msra.mxu0 %v129
    %148 = vmatprep.subr.bf16.mxu0 0
    %149 = vmatpush1.bf16.msra.mxu0 %v130
    %150 = vmatprep.subr.bf16.mxu0 0
    %151 = vmatpush1.bf16.msra.mxu0 %v131
    %152 = vmatprep.subr.bf16.mxu0 0
    %153 = vmatpush1.bf16.msra.mxu0 %v132
    %154 = vmatprep.subr.bf16.mxu0 0
    %155 = vmatpush1.bf16.msra.mxu0 %v133
    %156 = vmatprep.subr.bf16.mxu0 0
    %157 = vmatpush1.bf16.msra.mxu0 %v134
    %158 = vmatprep.subr.bf16.mxu0 0
    %159 = vmatpush1.bf16.msra.mxu0 0
    %160 = vmatprep.subr.bf16.mxu0 0
    %161 = vmatpush1.bf16.msra.mxu0 0
    %162 = vmatprep.subr.bf16.mxu0 0
    %163 = vmatpush1.bf16.msra.mxu0 0
    %164 = vmatprep.subr.bf16.mxu0 0
    %165 = vmatpush1.bf16.msra.mxu0 0
    %166 = vmatprep.subr.bf16.mxu0 0
    %167 = vmatpush1.bf16.msra.mxu0 0
    %168 = vmatprep.subr.bf16.mxu0 0
    %169 = vmatpush1.bf16.msra.mxu0 0
    %170 = vmatprep.subr.bf16.mxu0 0
    %171 = vmatpush1.bf16.msra.mxu0 0
    %172 = vmatprep.subr.bf16.mxu0 0
    %173 = vmatpush1.bf16.msra.mxu0 0
    %174 = vmatprep.mubr.bf16.mxu0 0
    %175 = vmatmul.mubr.bf16.gmra.mrb[0].mxu0 %v109
    %v176 = vpop.f32.mrb[0].mxu0
    %v177 = vadd.f32 %v140, %v176
    %v178 = vpop.f32.mrb[0].mxu0
    %v179 = vpop.f32.mrb[0].mxu0
    %v180 = vpop.f32.mrb[0].mxu0
    %181 = vdwg.mxu0
    %vm182 = vcmask 15360
    %183 = vst.msk [vmem:[%s6] sm:$0xff] %vm182, %v177
    // Predicated region
    $region26: #{tpu_custom_call.1} parent=1 // pred_check
      _
    $region27: #{tpu_custom_call.1} parent=1 // pred_check_branch
      %185 = sbr.rel (0) target = $region29
    $region28: #{tpu_custom_call.1} parent=1 // pred_region
      %s187 = ssub.s32 64, 64
      %188 = vsyncadd [#allocation4], %s187
      %s190 = sshll.u32 [#allocation5], 4
      %s191 = int_to_ptr.vmem [resolvable:$true] %s190
      %193 = dma.vmem_to_hbm [thread:$0]  %s191, 64, %s5, [#allocation4]
    $region29: #{tpu_custom_call.1} parent=1 // pred_fallthru
      _
    // Predicated region
    $region30: #{tpu_custom_call.1} parent=1 // pred_check
      _
    $region31: #{tpu_custom_call.1} parent=1 // pred_check_branch
      %195 = sbr.rel (0) target = $region33
    $region32: #{tpu_custom_call.1} parent=1 // pred_region
      _
    $region33: #{tpu_custom_call.1} parent=1 // pred_fallthru
      _
    // Predicated region
    $region34: #{tpu_custom_call.1} parent=1 // pred_check
      _
    $region35: #{tpu_custom_call.1} parent=1 // pred_check_branch
      %197 = sbr.rel (0) target = $region37
    $region36: #{tpu_custom_call.1} parent=1 // pred_region
      %198 = dma.done [#allocation4], 64
    $region37: #{tpu_custom_call.1} parent=1 // pred_fallthru
      _
    // Predicated region
    $region38: #{tpu_custom_call.1} parent=1 // pred_check
      _
    $region39: #{tpu_custom_call.1} parent=1 // pred_check_branch
      %200 = sbr.rel (0) target = $region41
    $region40: #{tpu_custom_call.1} parent=1 // pred_region
      _
    $region41: #{tpu_custom_call.1} parent=1 // pred_fallthru
      _
    %201 = vsyncpa [#allocation3], 1
    %202 = vsyncpa [#allocation4], 1

</llo_original>
